<compile_context>
chip_gen: v7x
topology: tpu7x:2x2x1
jax: 0.10.0
libtpu: 0.0.40
codegen_flags: <defaults>
</compile_context>

<pallas_src>
import math

import jax
import jax.numpy as jnp
from jax.experimental import pallas as pl
from jax.experimental.pallas import tpu as pltpu


# ----------------------------------------------------------------------------
# Pass 1: per-(batch, channel) sum and sum-of-squares, native (N, C, S) layout.
# Grid (N, S//TS), reduction axis last ("arbitrary"); (C, 1) accumulator block
# stays resident across the reduction axis (P3 pattern).
# ----------------------------------------------------------------------------
def gn_sums_kernel(x_ref, sum_ref, sq_ref):
    @pl.when(pl.program_id(1) == 0)
    def _():
        sum_ref[...] = jnp.zeros_like(sum_ref)
        sq_ref[...] = jnp.zeros_like(sq_ref)

    x = x_ref[0]                                          # (C, TS) f32
    sum_ref[0] += jnp.sum(x, axis=1, keepdims=True)       # (C, 1)
    sq_ref[0] += jnp.sum(x * x, axis=1, keepdims=True)    # (C, 1)


# ----------------------------------------------------------------------------
# Pass 2: GroupNorm affine (pre-folded scale/shift) + fused K/V projection.
# One wide (2C, C) x (C, TS) MXU op per tile; K stored as (S, C) (one in-pass
# f32 transpose per TS tile, done once per element, never per query tile),
# V stored pre-transposed as V^T (C, S) so pass 3 stays transpose-free.
# ----------------------------------------------------------------------------
def gn_kv_kernel(x_ref, scale_ref, shift_ref, wkvt_ref, bkvt_ref, k_ref, vt_ref):
    x_t = x_ref[0]                                        # (C, TS) f32, native
    xn_t = (x_t * scale_ref[0] + shift_ref[0]).astype(jnp.bfloat16)
    kv_t = jnp.dot(wkvt_ref[...], xn_t,
                   preferred_element_type=jnp.float32) + bkvt_ref[...]   # (2C, TS)
    c = x_t.shape[0]
    k_ref[0] = jnp.transpose(kv_t[:c]).astype(jnp.bfloat16)   # (TS, C)
    vt_ref[0] = kv_t[c:].astype(jnp.bfloat16)                  # (C, TS)


# ----------------------------------------------------------------------------
# Pass 3: attention for one query tile against resident K / V^T, output
# projection and residual, all in the transposed (channel-major) orientation
# so the output block is written straight into the native (N, C, S) layout.
# Grid (N, S//TQ), both axes "parallel".
# ----------------------------------------------------------------------------
def attn_kernel(x_ref, scale_ref, shift_ref, wqt_ref, bqt_ref,
                k_ref, vt_ref, wot_ref, bot_ref, o_ref):
    x_t = x_ref[0]                                        # (C, TQ) f32, native
    xn_t = (x_t * scale_ref[0] + shift_ref[0]).astype(jnp.bfloat16)

    # Q^T (C, TQ); 1/sqrt(C) already folded into wq^T / bq^T.
    q_t = (jnp.dot(wqt_ref[...], xn_t, preferred_element_type=jnp.float32)
           + bqt_ref[...]).astype(jnp.bfloat16)

    k = k_ref[0]                                          # (S, C)  bf16, resident
    v_t = vt_ref[0]                                       # (C, S)  bf16, resident

    # scores^T (S, TQ) = K @ Q^T  — plain NN matmul, no K relayout.
    s_t = jnp.dot(k, q_t, preferred_element_type=jnp.float32)

    m = jnp.max(s_t, axis=0, keepdims=True)               # (1, TQ)
    p_t = jnp.exp(s_t - m)                                # f32
    l = jnp.sum(p_t, axis=0, keepdims=True)               # (1, TQ)

    # att^T (C, TQ) = V^T @ P^T — plain NN matmul.
    att_t = jnp.dot(v_t, p_t.astype(jnp.bfloat16),
                    preferred_element_type=jnp.float32)
    att_t = att_t * pl.reciprocal(l, approx=True)         # EUP reciprocal

    out_t = (jnp.dot(wot_ref[...], att_t.astype(jnp.bfloat16),
                     preferred_element_type=jnp.float32) + bot_ref[...])
    o_ref[0] = out_t + x_t                                # residual, f32, native


# ----------------------------------------------------------------------------
# Wrapper helpers
# ----------------------------------------------------------------------------
def _vmem_capacity_bytes(default=64 * 1024 * 1024):
    try:
        info = pltpu.get_tpu_info()
        cap = getattr(info, "vmem_capacity_bytes", None)
        if cap:
            return int(cap)
    except Exception:
        pass
    return default


def _pick_tile(s, target, align=128):
    """Largest lane-aligned (multiple of 128) divisor of s that is <= target.

    Falls back to the full extent when no aligned divisor exists (correct but
    VMEM-heavier).  TODO(synk): masked-tail path for awkward H*W products.
    """
    if s <= target:
        return s
    t = (min(target, s) // align) * align
    while t >= align:
        if s % t == 0:
            return t
        t -= align
    return s


def _attn_vmem_bytes(s, c, tq):
    """Conservative pass-3 VMEM estimate (assumes double-buffered K/V^T)."""
    kv = 2 * (2 * s * c * 2)           # K (S,C) + V^T (C,S), bf16, 2 buffers
    io = 2 * 2 * (c * tq * 4)          # x-in + out tiles, f32, 2 buffers
    scores = s * tq * 4 + s * tq * 2   # scores^T f32 + bf16 copy of P^T
    small = 4 * c * tq * 4             # q^T / att^T / out^T temporaries
    wts = 2 * 2 * (c * c * 2)          # wq^T + wo^T, bf16, 2 buffers
    return kv + io + scores + small + wts


# Resolved once: does this JAX/Mosaic accept pipeline_mode=pl.Buffered(1)?
_KV_SINGLE_BUFFER = None


# ----------------------------------------------------------------------------
# Wrapper
# ----------------------------------------------------------------------------
def vae_attention_block(x_nchw, params, *, num_groups=32, eps=1e-5,
                        tq=None, ts=None):
    """GroupNorm(32, C) + single-head self-attention + residual (NCHW in/out).

    K/V^T for one batch element are held resident in bf16 (2 * S*C*2 bytes);
    fine for typical VAE bottleneck shapes (S <= 4096, C <= 512).  Tile sizes
    and vmem_limit_bytes are derived from the device's VMEM capacity
    (v5e/v6e: tq=512, ~96 MiB limit; v7x: tq=256, ~48 MiB limit) and clamped
    by an explicit pass-3 VMEM budget.
    """
    global _KV_SINGLE_BUFFER

    n, c, h, w = x_nchw.shape
    s = h * w
    assert c % num_groups == 0 and c % 8 == 0
    g = num_groups
    cg = c // g

    cap = _vmem_capacity_bytes()
    vmem_limit = int(min(cap * 3 // 4, 100 * 1024 * 1024))
    if tq is None:
        tq = 512 if cap >= 96 * 1024 * 1024 else 256
    if ts is None:
        ts = 512
    tq = _pick_tile(s, tq)
    ts = _pick_tile(s, ts)
    budget = (vmem_limit * 7) // 10
    while tq > 128 and _attn_vmem_bytes(s, c, tq) > budget:
        new_tq = _pick_tile(s, max(tq // 2, 128))
        if new_tq >= tq:
            break
        tq = new_tq

    # Native layout: NCHW -> (N, C, S) is a free reshape (no HBM transpose).
    x_ncs = x_nchw.reshape(n, c, s).astype(jnp.float32)

    gamma = params["gamma"].astype(jnp.float32)
    beta = params["beta"].astype(jnp.float32)

    # Pre-transposed bf16 weights (y^T = W^T @ x^T); fold 1/sqrt(C) into Q.
    inv_sqrt_c = 1.0 / math.sqrt(float(c))
    wqt = (params["wq"].astype(jnp.float32).T * inv_sqrt_c).astype(jnp.bfloat16)
    bqt = (params["bq"].astype(jnp.float32) * inv_sqrt_c).reshape(c, 1)
    wkvt = jnp.concatenate(
        [params["wk"].T, params["wv"].T], axis=0).astype(jnp.bfloat16)      # (2C, C)
    bkvt = jnp.concatenate(
        [params["bk"], params["bv"]], axis=0).reshape(2 * c, 1).astype(jnp.float32)
    wot = params["wo"].T.astype(jnp.bfloat16)
    bot = params["bo"].reshape(c, 1).astype(jnp.float32)

    # ---- Pass 1: per-channel sums for GroupNorm statistics -----------------
    sum_c, sq_c = pl.pallas_call(
        gn_sums_kernel,
        out_shape=(jax.ShapeDtypeStruct((n, c, 1), jnp.float32),
                   jax.ShapeDtypeStruct((n, c, 1), jnp.float32)),
        grid_spec=pltpu.PrefetchScalarGridSpec(
            num_scalar_prefetch=0,
            grid=(n, s // ts),
            in_specs=[pl.BlockSpec((1, c, ts), lambda b, si: (b, 0, si))],
            out_specs=[pl.BlockSpec((1, c, 1), lambda b, si: (b, 0, 0)),
                       pl.BlockSpec((1, c, 1), lambda b, si: (b, 0, 0))],
        ),
        compiler_params=pltpu.CompilerParams(
            dimension_semantics=("parallel", "arbitrary"),
            vmem_limit_bytes=vmem_limit),
    )(x_ncs)

    # Tiny finalization on (N, C) values; fold gamma/beta so the in-kernel
    # normalization is a single FMA (x * scale + shift).
    # NOTE: variance is E[x^2] - E[x]^2 in f32 (single streaming pass); clamp
    # guards tiny negative cancellation.  Adequate for VAE-scale activations.
    cnt = float(s * cg)
    sum_g = sum_c[..., 0].reshape(n, g, cg).sum(axis=-1)
    sq_g = sq_c[..., 0].reshape(n, g, cg).sum(axis=-1)
    mean_g = sum_g / cnt
    var_g = jnp.maximum(sq_g / cnt - mean_g * mean_g, 0.0)
    istd_g = jax.lax.rsqrt(var_g + eps)
    mean_ch = jnp.repeat(mean_g, cg, axis=-1).reshape(n, c, 1)
    istd_ch = jnp.repeat(istd_g, cg, axis=-1).reshape(n, c, 1)
    scale_c = gamma.reshape(1, c, 1) * istd_ch              # (N, C, 1)
    shift_c = beta.reshape(1, c, 1) - mean_ch * scale_c     # (N, C, 1)

    # ---- Pass 2: normalize + fused K/V projection (K as (S,C), V as V^T) ---
    k_snc, vt_ncs = pl.pallas_call(
        gn_kv_kernel,
        out_shape=(jax.ShapeDtypeStruct((n, s, c), jnp.bfloat16),
                   jax.ShapeDtypeStruct((n, c, s), jnp.bfloat16)),
        grid_spec=pltpu.PrefetchScalarGridSpec(
            num_scalar_prefetch=0,
            grid=(n, s // ts),
            in_specs=[
                pl.BlockSpec((1, c, ts), lambda b, si: (b, 0, si)),
                pl.BlockSpec((1, c, 1), lambda b, si: (b, 0, 0)),
                pl.BlockSpec((1, c, 1), lambda b, si: (b, 0, 0)),
                pl.BlockSpec((2 * c, c), lambda b, si: (0, 0)),
                pl.BlockSpec((2 * c, 1), lambda b, si: (0, 0)),
            ],
            out_specs=[
                pl.BlockSpec((1, ts, c), lambda b, si: (b, si, 0)),
                pl.BlockSpec((1, c, ts), lambda b, si: (b, 0, si)),
            ],
        ),
        compiler_params=pltpu.CompilerParams(
            dimension_semantics=("parallel", "parallel"),
            vmem_limit_bytes=vmem_limit),
    )(x_ncs, scale_c, shift_c, wkvt, bkvt)

    # ---- Pass 3: attention (query-tiled, resident K/V^T) + out proj + resid
    cost = pl.CostEstimate(
        flops=int(n * (4 * s * s * c + 4 * s * c * c)),
        transcendentals=int(n * s * s),
        bytes_accessed=int(n * (2 * s * c * 4 + 2 * s * c * 2) + 4 * c * c * 2))

    def run_pass3(single_buffer_kv):
        kv_kwargs = {"pipeline_mode": pl.Buffered(1)} if single_buffer_kv else {}
        k_spec = pl.BlockSpec((1, s, c), lambda b, qi: (b, 0, 0), **kv_kwargs)
        vt_spec = pl.BlockSpec((1, c, s), lambda b, qi: (b, 0, 0), **kv_kwargs)
        return pl.pallas_call(
            attn_kernel,
            out_shape=jax.ShapeDtypeStruct((n, c, s), jnp.float32),
            grid_spec=pltpu.PrefetchScalarGridSpec(
                num_scalar_prefetch=0,
                grid=(n, s // tq),
                in_specs=[
                    pl.BlockSpec((1, c, tq), lambda b, qi: (b, 0, qi)),  # x
                    pl.BlockSpec((1, c, 1), lambda b, qi: (b, 0, 0)),    # scale
                    pl.BlockSpec((1, c, 1), lambda b, qi: (b, 0, 0)),    # shift
                    pl.BlockSpec((c, c), lambda b, qi: (0, 0)),          # wq^T
                    pl.BlockSpec((c, 1), lambda b, qi: (0, 0)),          # bq^T
                    k_spec,                                              # K
                    vt_spec,                                             # V^T
                    pl.BlockSpec((c, c), lambda b, qi: (0, 0)),          # wo^T
                    pl.BlockSpec((c, 1), lambda b, qi: (0, 0)),          # bo^T
                ],
                out_specs=pl.BlockSpec((1, c, tq), lambda b, qi: (b, 0, qi)),
            ),
            compiler_params=pltpu.CompilerParams(
                dimension_semantics=("parallel", "parallel"),
                vmem_limit_bytes=vmem_limit),
            cost_estimate=cost,
            input_output_aliases={0: 0},   # out (N,C,S) f32 aliases x_ncs
        )(x_ncs, scale_c, shift_c, wqt, bqt, k_snc, vt_ncs, wot, bot)

    if _KV_SINGLE_BUFFER is None:
        try:
            out_ncs = jax.block_until_ready(run_pass3(True))
            _KV_SINGLE_BUFFER = True
        except Exception:
            _KV_SINGLE_BUFFER = False
            # x_ncs may have been invalidated by a failed donation attempt.
            x_ncs = x_nchw.reshape(n, c, s).astype(jnp.float32)
            out_ncs = run_pass3(False)
    else:
        out_ncs = run_pass3(_KV_SINGLE_BUFFER)

    # Native (N, C, S) -> NCHW is a free reshape (no HBM transpose).
    return out_ncs.reshape(n, c, h, w).astype(x_nchw.dtype)


# ----------------------------------------------------------------------------
# Pure-JAX reference (mirrors the PyTorch forward) for a correctness check.
# ----------------------------------------------------------------------------
def reference(x_nchw, params, *, num_groups=32, eps=1e-5):
    n, c, h, w = x_nchw.shape
    s = h * w
    cg = c // num_groups
    x = x_nchw.astype(jnp.float32)

    xg = x.reshape(n, num_groups, cg, h, w)
    mean = xg.mean(axis=(2, 3, 4), keepdims=True)
    var = xg.var(axis=(2, 3, 4), keepdims=True)
    xn = ((xg - mean) / jnp.sqrt(var + eps)).reshape(n, c, h, w)
    xn = xn * params["gamma"].reshape(1, c, 1, 1) + params["beta"].reshape(1, c, 1, 1)

    t = jnp.transpose(xn.reshape(n, c, s), (0, 2, 1))                  # (N, S, C)
    q = t @ params["wq"] + params["bq"]
    k = t @ params["wk"] + params["bk"]
    v = t @ params["wv"] + params["bv"]
    sc = (q @ jnp.swapaxes(k, -1, -2)) / math.sqrt(float(c))
    p = jax.nn.softmax(sc, axis=-1)
    out = p @ v
    out = out @ params["wo"] + params["bo"]
    out = jnp.transpose(out, (0, 2, 1)).reshape(n, c, h, w)
    return out + x


if __name__ == "__main__":
    # Channels must be divisible by 32 (GroupNorm(32, C)); 128 keeps every
    # in-kernel transpose / block lane-aligned at this small test size.
    N, C, H, W = 2, 128, 16, 16

    key = jax.random.PRNGKey(0)
    ks = jax.random.split(key, 11)
    wscale = 1.0 / math.sqrt(C)
    params = {
        "gamma": 1.0 + 0.1 * jax.random.normal(ks[9], (C,), jnp.float32),
        "beta": 0.1 * jax.random.normal(ks[10], (C,), jnp.float32),
        # weights stored as (in, out) so y = x @ W + b
        "wq": jax.random.normal(ks[0], (C, C), jnp.float32) * wscale,
        "wk": jax.random.normal(ks[1], (C, C), jnp.float32) * wscale,
        "wv": jax.random.normal(ks[2], (C, C), jnp.float32) * wscale,
        "bq": jax.random.normal(ks[3], (C,), jnp.float32) * 0.02,
        "bk": jax.random.normal(ks[4], (C,), jnp.float32) * 0.02,
        "bv": jax.random.normal(ks[5], (C,), jnp.float32) * 0.02,
        "wo": jax.random.normal(ks[6], (C, C), jnp.float32) * wscale,
        "bo": jax.random.normal(ks[7], (C,), jnp.float32) * 0.02,
    }

    x = jax.random.normal(ks[8], (N, C, H, W), jnp.float32)

    # Small tiles so the test exercises the multi-tile grid paths (S = 256).
    out = vae_attention_block(x, params, tq=128, ts=128)
    out = jax.block_until_ready(out)

    ref = jax.block_until_ready(reference(x, params))
    assert out.shape == (N, C, H, W)
    # bf16 MXU operands (f32 accumulation) + approx reciprocal -> loosened tol.
    err = float(jnp.max(jnp.abs(out - ref)))
    assert err < 5e-2, err

    print("KERNEL_OK")
</pallas_src>

<mosaic_0001>
module attributes {stable_mosaic.version = 11 : i64} {
  func.func @gn_sums_kernel(%arg0: i32, %arg1: i32, %arg2: memref<1x128x128xf32, #tpu.memory_space<vmem>>, %arg3: memref<1x128x1xf32, #tpu.memory_space<vmem>>, %arg4: memref<1x128x1xf32, #tpu.memory_space<vmem>>) attributes {dimension_semantics = [#tpu.dimension_semantics<parallel>, #tpu.dimension_semantics<arbitrary>], iteration_bounds = array<i64: 2, 2>, scalar_prefetch = 0 : i64, scratch_operands = 0 : i64, tpu.core_type = #tpu.core_type<tc>, window_params = [{transform_indices = @transform_0, window_bounds = array<i64: 1, 128, 128>}, {transform_indices = @transform_1, window_bounds = array<i64: 1, 128, 1>}, {transform_indices = @transform_2, window_bounds = array<i64: 1, 128, 1>}]} {
    %c0_i32 = arith.constant 0 : i32
    %0 = arith.cmpi eq, %arg1, %c0_i32 : i32
    %1 = arith.extui %0 : i1 to i32
    %c0_i32_0 = arith.constant 0 : i32
    %2 = arith.cmpi ne, %1, %c0_i32_0 : i32
    scf.if %2 {
      %cst_16 = arith.constant 0.000000e+00 : f32
      %22 = vector.broadcast %cst_16 : f32 to vector<1x128x1xf32>
      %c0_17 = arith.constant 0 : index
      %c0_18 = arith.constant 0 : index
      %c0_19 = arith.constant 0 : index
      %23 = vector.load %arg3[%c0_17, %c0_18, %c0_19] : memref<1x128x1xf32, #tpu.memory_space<vmem>>, vector<1x128x1xf32>
      tpu.vector_store %arg3[%c0_17, %c0_18, %c0_19], %22 {strides = array<i32>} : memref<1x128x1xf32, #tpu.memory_space<vmem>>, vector<1x128x1xf32>,
      %cst_20 = arith.constant 0.000000e+00 : f32
      %24 = vector.broadcast %cst_20 : f32 to vector<1x128x1xf32>
      %c0_21 = arith.constant 0 : index
      %c0_22 = arith.constant 0 : index
      %c0_23 = arith.constant 0 : index
      %25 = vector.load %arg4[%c0_21, %c0_22, %c0_23] : memref<1x128x1xf32, #tpu.memory_space<vmem>>, vector<1x128x1xf32>
      tpu.vector_store %arg4[%c0_21, %c0_22, %c0_23], %24 {strides = array<i32>} : memref<1x128x1xf32, #tpu.memory_space<vmem>>, vector<1x128x1xf32>,
    } else {
    }
    %c0 = arith.constant 0 : index
    %c0_1 = arith.constant 0 : index
    %c0_2 = arith.constant 0 : index
    %3 = vector.load %arg2[%c0, %c0_1, %c0_2] : memref<1x128x128xf32, #tpu.memory_space<vmem>>, vector<1x128x128xf32>
    %4 = vector.shape_cast %3 : vector<1x128x128xf32> to vector<128x128xf32>
    %c0_3 = arith.constant 0 : index
    %c0_4 = arith.constant 0 : index
    %c0_5 = arith.constant 0 : index
    %5 = vector.load %arg3[%c0_3, %c0_4, %c0_5] : memref<1x128x1xf32, #tpu.memory_space<vmem>>, vector<1x128x1xf32>
    %6 = vector.shape_cast %5 : vector<1x128x1xf32> to vector<128x1xf32>
    %cst = arith.constant dense<0.000000e+00> : vector<128xf32>
    %7 = vector.multi_reduction <add>, %4, %cst [1] : vector<128x128xf32> to vector<128xf32>
    %8 = vector.shape_cast %7 : vector<128xf32> to vector<128x1xf32>
    %9 = arith.addf %6, %8 : vector<128x1xf32>
    %c0_6 = arith.constant 0 : index
    %c0_7 = arith.constant 0 : index
    %c0_8 = arith.constant 0 : index
    %10 = vector.load %arg3[%c0_6, %c0_7, %c0_8] : memref<1x128x1xf32, #tpu.memory_space<vmem>>, vector<1x128x1xf32>
    %11 = vector.shape_cast %10 : vector<1x128x1xf32> to vector<128x1xf32>
    %12 = vector.shape_cast %9 : vector<128x1xf32> to vector<1x128x1xf32>
    tpu.vector_store %arg3[%c0_6, %c0_7, %c0_8], %12 {strides = array<i32>} : memref<1x128x1xf32, #tpu.memory_space<vmem>>, vector<1x128x1xf32>,
    %c0_9 = arith.constant 0 : index
    %c0_10 = arith.constant 0 : index
    %c0_11 = arith.constant 0 : index
    %13 = vector.load %arg4[%c0_9, %c0_10, %c0_11] : memref<1x128x1xf32, #tpu.memory_space<vmem>>, vector<1x128x1xf32>
    %14 = vector.shape_cast %13 : vector<1x128x1xf32> to vector<128x1xf32>
    %15 = arith.mulf %4, %4 : vector<128x128xf32>
    %cst_12 = arith.constant dense<0.000000e+00> : vector<128xf32>
    %16 = vector.multi_reduction <add>, %15, %cst_12 [1] : vector<128x128xf32> to vector<128xf32>
    %17 = vector.shape_cast %16 : vector<128xf32> to vector<128x1xf32>
    %18 = arith.addf %14, %17 : vector<128x1xf32>
    %c0_13 = arith.constant 0 : index
    %c0_14 = arith.constant 0 : index
    %c0_15 = arith.constant 0 : index
    %19 = vector.load %arg4[%c0_13, %c0_14, %c0_15] : memref<1x128x1xf32, #tpu.memory_space<vmem>>, vector<1x128x1xf32>
    %20 = vector.shape_cast %19 : vector<1x128x1xf32> to vector<128x1xf32>
    %21 = vector.shape_cast %18 : vector<128x1xf32> to vector<1x128x1xf32>
    tpu.vector_store %arg4[%c0_13, %c0_14, %c0_15], %21 {strides = array<i32>} : memref<1x128x1xf32, #tpu.memory_space<vmem>>, vector<1x128x1xf32>,
    return
  }
  func.func @transform_0(%arg0: i32, %arg1: i32) -> (i32, i32, i32) {
    %c0_i32 = arith.constant 0 : i32
    %c0_i32_0 = arith.constant 0 : i32
    return %arg0, %c0_i32, %arg1 : i32, i32, i32
  }
  func.func @transform_1(%arg0: i32, %arg1: i32) -> (i32, i32, i32) {
    %c0_i32 = arith.constant 0 : i32
    %c0_i32_0 = arith.constant 0 : i32
    %c0_i32_1 = arith.constant 0 : i32
    return %arg0, %c0_i32, %c0_i32_0 : i32, i32, i32
  }
  func.func @transform_2(%arg0: i32, %arg1: i32) -> (i32, i32, i32) {
    %c0_i32 = arith.constant 0 : i32
    %c0_i32_0 = arith.constant 0 : i32
    %c0_i32_1 = arith.constant 0 : i32
    return %arg0, %c0_i32, %c0_i32_0 : i32, i32, i32
  }
}

</mosaic_0001>

<llo_original>
// kernel: tpu_custom_call.1
$region0: #{tpu_custom_call.1}
  #allocation0 [shape = 'u32[]', space=smem, size = 0x4, offset = 0x4, fixed_abs, tag = 'smem constant byte address 0x4 - core index']
  #allocation1 [shape = 'u32[144,128]{1,0:T(1,128)}', space=vmem, size = 0x12000, scoped, tag = 'internal scratch']
  %s0 = inlined_call_operand.hbm [shape: f32[2,128,256], index: 0, kind: input, shape index: {}]
  %s1 = inlined_call_operand.vmem [shape: f32[2,128,1], index: 1, kind: output, shape index: {0}]
  %s2 = inlined_call_operand.vmem [shape: f32[2,128,1], index: 2, kind: output, shape index: {1}]
  %3 = xla_tuple %s1, %s2
  %s4 = sld [smem:[#allocation0]]
  $region53: #{tpu_custom_call.1} parent=0
    _
  %s6 = ssub.s32 1, %s4
  %s7 = scalar_select 0, %s6, %s4
  $region1: #{tpu_custom_call.1} parent=0
    #allocation2 [shape = 'u8[131072]{0}', space=vmem, size = 0x20000, scoped, tag = 'input window, operand 0']
    #allocation3 [shape = 's32[2]{0}', space=sflag, size = 0x8, scoped, tag = 'scoped memory for tpu_custom_call.1']
    %8 = vsyncpa [#allocation3], 0
    %s9 = scalar_lea.sflag [#allocation3], 1
    %10 = vsyncpa %s9, 0
    loop: start=0, step=1, limit=6
    $region2: #{tpu_custom_call.1} parent=1 // loop_pre_header
      _
    $region3: #{tpu_custom_call.1} parent=1 // loop_header
      %s12 = sphi 0, %s16
      %p13 = scmp.ge.s32.totalorder %s12, 6
      %s19 = sphi 0, %s31
      %s20 = sphi 0, %s27
      %s21 = sphi 0, %s19
      %s22 = sphi 0, %s20
      %s23 = sphi 0, %s21
      %s24 = sphi 0, %s22
      %s36 = sphi 0, %s38
      %s39 = sphi 0, %s36
      %s40 = sphi 0, %s39
      %s56 = sphi 0, %s40
      %s62 = sphi 0, %s64
      %s65 = sphi 0, %s62
      %s66 = sphi 0, %s65
      %s82 = sphi 0, %s66
      %s88 = sphi 0, %s90
      %s91 = sphi 0, %s88
      %s92 = sphi 0, %s91
      %s108 = sphi 0, %s92
    $region4: #{tpu_custom_call.1} parent=1 // loop_header_branch
      %15 = sbr.rel (%p13) target = $region8
    $region5: #{tpu_custom_call.1} parent=1 // loop_body
      %s17 = ssub.s32 %s12, 1
      %s18 = ssub.s32 %s12, 2
      %s25 = sadd.s32 1, %s20
      %p26 = scmp.ge.s32.totalorder %s25, 2
      %s27 = scalar_select %p26, 0, %s25
      %s28 = sadd.s32 1, %s19
      %s29 = scalar_select %p26, %s28, %s19
      %p30 = scmp.ge.s32.totalorder %s29, 2
      %s31 = scalar_select %p30, 0, %s29
      %s32 = ssub.s32 %s19, %s31
      %s33 = ssub.s32 %s20, %s27
      %s34 = sor.u32 %s32, %s33
      %p35 = scmp.eq.s32.totalorder %s34, 0
      %s37 = sadd.s32 %s36, 1
      %s38 = scalar_select %p35, %s36, %s37
      %p41 = pneg %p35
      %p42 = scmp.eq.s32.totalorder %s12, 3
      %p43 = por %p41, %p42
      %p44 = scmp.ne.s32.totalorder %s36, %s39
      %p45 = scmp.eq.s32.totalorder %s12, 0
      %p46 = por %p44, %p45
      %p47 = scmp.ne.s32.totalorder %s36, %s39
      %p48 = scmp.eq.s32.totalorder %s17, 3
      %p49 = por %p47, %p48
      %p50 = scmp.ne.s32.totalorder %s39, %s40
      %p51 = scmp.eq.s32.totalorder %s17, 0
      %p52 = por %p50, %p51
      %p53 = scmp.ne.s32.totalorder %s39, %s40
      %p54 = scmp.eq.s32.totalorder %s18, 3
      %p55 = por %p53, %p54
      %p57 = scmp.ne.s32.totalorder %s40, %s56
      %p58 = scmp.eq.s32.totalorder %s18, 0
      %p59 = por %p57, %p58
      %s60 = ssub.s32 %s19, %s31
      %p61 = scmp.eq.s32.totalorder %s60, 0
      %s63 = sadd.s32 %s62, 1
      %s64 = scalar_select %p61, %s62, %s63
      %p67 = pneg %p61
      %p68 = scmp.eq.s32.totalorder %s12, 3
      %p69 = por %p67, %p68
      %p70 = scmp.ne.s32.totalorder %s62, %s65
      %p71 = scmp.eq.s32.totalorder %s12, 0
      %p72 = por %p70, %p71
      %p73 = scmp.ne.s32.totalorder %s62, %s65
      %p74 = scmp.eq.s32.totalorder %s17, 3
      %p75 = por %p73, %p74
      %p76 = scmp.ne.s32.totalorder %s65, %s66
      %p77 = scmp.eq.s32.totalorder %s17, 0
      %p78 = por %p76, %p77
      %p79 = scmp.ne.s32.totalorder %s65, %s66
      %p80 = scmp.eq.s32.totalorder %s18, 3
      %p81 = por %p79, %p80
      %p83 = scmp.ne.s32.totalorder %s66, %s82
      %p84 = scmp.eq.s32.totalorder %s18, 0
      %p85 = por %p83, %p84
      %s86 = ssub.s32 %s19, %s31
      %p87 = scmp.eq.s32.totalorder %s86, 0
      %s89 = sadd.s32 %s88, 1
      %s90 = scalar_select %p87, %s88, %s89
      %p93 = pneg %p87
      %p94 = scmp.eq.s32.totalorder %s12, 3
      %p95 = por %p93, %p94
      %p96 = scmp.ne.s32.totalorder %s88, %s91
      %p97 = scmp.eq.s32.totalorder %s12, 0
      %p98 = por %p96, %p97
      %p99 = scmp.ne.s32.totalorder %s88, %s91
      %p100 = scmp.eq.s32.totalorder %s17, 3
      %p101 = por %p99, %p100
      %p102 = scmp.ne.s32.totalorder %s91, %s92
      %p103 = scmp.eq.s32.totalorder %s17, 0
      %p104 = por %p102, %p103
      %p105 = scmp.ne.s32.totalorder %s91, %s92
      %p106 = scmp.eq.s32.totalorder %s18, 3
      %p107 = por %p105, %p106
      %p109 = scmp.ne.s32.totalorder %s92, %s108
      %p110 = scmp.eq.s32.totalorder %s18, 0
      %p111 = por %p109, %p110
      %p112 = scmp.le.s32.totalorder 1, %s12
      %p113 = scmp.lt.s32.totalorder %s12, 5
      %p114 = pnand %p112, %p113
      %p115 = pneg %p114
      // Predicated region
      $region9: #{tpu_custom_call.1} parent=5 // pred_check
        _
      $region10: #{tpu_custom_call.1} parent=5 // pred_check_branch
        %117 = sbr.rel (%p114) target = $region12
      $region11: #{tpu_custom_call.1} parent=5 // pred_region
        %s118 = ssub.s32 %s12, 1
      $region12: #{tpu_custom_call.1} parent=5 // pred_fallthru
        _
      %p119 = scmp.lt.s32.totalorder %s12, 4
      // Predicated region
      $region13: #{tpu_custom_call.1} parent=5 // pred_check
        %p120 = pneg %p119
      $region14: #{tpu_custom_call.1} parent=5 // pred_check_branch
        %122 = sbr.rel (%p120) target = $region16
      $region15: #{tpu_custom_call.1} parent=5 // pred_region
        // Predicated region
        $region17: #{tpu_custom_call.1} parent=15 // pred_check
          %p123 = pneg %p46
        $region18: #{tpu_custom_call.1} parent=15 // pred_check_branch
          %125 = sbr.rel (%p123) target = $region20
        $region19: #{tpu_custom_call.1} parent=15 // pred_region
          %s126 = sand.u32 %s36, 1
          %s127 = scalar_lea.sflag [#allocation3], %s126
          %s128 = sand.u32 %s36, 1
          %s129 = smul.addr %s128, 128
          %s130 = scalar_lea.vmem [#allocation2], %s129
          %s132 = ssub.s32 2048, 2048
          %133 = vsyncadd %s127, %s132
          %s134 = smul.addr %s19, 32
          %s135 = sadd.s32 %s20, %s134
          %s136 = smul.addr %s135, 128
          %s137 = scalar_lea.hbm %s0, %s136
          %s138 = sshll.u32 %s130, 4
          %s139 = int_to_ptr.vmem [resolvable:$true] %s138
          %144 = dma.hbm_to_vmem [thread:$0]  %s137, 2048, %s139, %s127, 256, 128, 8
        $region20: #{tpu_custom_call.1} parent=15 // pred_fallthru
          _
      $region16: #{tpu_custom_call.1} parent=5 // pred_fallthru
        _
      %p145 = scmp.le.s32.totalorder 1, %s12
      %p146 = scmp.lt.s32.totalorder %s12, 5
      %p147 = pnand %p145, %p146
      %p148 = pneg %p147
      // Predicated region
      $region21: #{tpu_custom_call.1} parent=5 // pred_check
        _
      $region22: #{tpu_custom_call.1} parent=5 // pred_check_branch
        %150 = sbr.rel (%p147) target = $region24
      $region23: #{tpu_custom_call.1} parent=5 // pred_region
        %s151 = ssub.s32 %s12, 1
        %s152 = sand.u32 %s39, 1
        %s153 = scalar_lea.sflag [#allocation3], %s152
        %s154 = sand.u32 %s39, 1
        %s155 = smul.addr %s154, 128
        %s156 = scalar_lea.vmem [#allocation2], %s155
        // Predicated region
        $region25: #{tpu_custom_call.1} parent=23 // pred_check
          %p157 = pneg %p52
        $region26: #{tpu_custom_call.1} parent=23 // pred_check_branch
          %159 = sbr.rel (%p157) target = $region28
        $region27: #{tpu_custom_call.1} parent=23 // pred_region
          %160 = dma.done %s153, 2048
        $region28: #{tpu_custom_call.1} parent=23 // pred_fallthru
          _
        %s161 = sand.u32 %s39, 1
        %s162 = scalar_lea.sflag [#allocation3], %s161
        %s163 = sand.u32 %s39, 1
        %s164 = smul.addr %s163, 128
        %s165 = scalar_lea.vmem [#allocation2], %s164
        %p166 = pneg %p52
        %p167 = pneg %p49
        %p168 = pneg %p78
        %p169 = pneg %p75
        %p170 = scmp.lt.s32.totalorder %s21, 1
        %s171 = scalar_select %p170, %s21, 1
        %s172 = smul.addr %s171, 16
        %s173 = smul.addr %s172, 8
        %s174 = scalar_lea.vmem %s1, %s173
        %p175 = pneg %p104
        %p176 = pneg %p101
        %p177 = scmp.lt.s32.totalorder %s21, 1
        %s178 = scalar_select %p177, %s21, 1
        %s179 = smul.addr %s178, 16
        %s180 = smul.addr %s179, 8
        %s181 = scalar_lea.vmem %s2, %s180
        %p182 = scmp.lt.s32.totalorder %s21, 1
        %s183 = scalar_select %p182, %s21, 1
        %s184 = smul.addr %s183, 16
        %s185 = smul.addr %s184, 8
        %s186 = scalar_lea.vmem %s1, %s185
        %p187 = scmp.lt.s32.totalorder %s21, 1
        %s188 = scalar_select %p187, %s21, 1
        %s189 = smul.addr %s188, 16
        %s190 = smul.addr %s189, 8
        %s191 = scalar_lea.vmem %s2, %s190
        %p192 = scmp.eq.s32.totalorder %s22, 0
        // Predicated region
        $region29: #{tpu_custom_call.1} parent=23 // pred_check
          %p193 = pneg %p192
        $region30: #{tpu_custom_call.1} parent=23 // pred_check_branch
          %195 = sbr.rel (%p193) target = $region32
        $region31: #{tpu_custom_call.1} parent=23 // pred_region
          %vm196 = vcmask 7168
          %197 = vst.msk [vmem:[%s186] sm:$0xff] %vm196, 0.0
          %198 = vst.msk [vmem:[%s186 + $0x8] sm:$0xff] %vm196, 0.0
          %199 = vst.msk [vmem:[%s186 + $0x10] sm:$0xff] %vm196, 0.0
          %200 = vst.msk [vmem:[%s186 + $0x18] sm:$0xff] %vm196, 0.0
          %201 = vst.msk [vmem:[%s186 + $0x20] sm:$0xff] %vm196, 0.0
          %202 = vst.msk [vmem:[%s186 + $0x28] sm:$0xff] %vm196, 0.0
          %203 = vst.msk [vmem:[%s186 + $0x30] sm:$0xff] %vm196, 0.0
          %204 = vst.msk [vmem:[%s186 + $0x38] sm:$0xff] %vm196, 0.0
          %205 = vst.msk [vmem:[%s186 + $0x40] sm:$0xff] %vm196, 0.0
          %206 = vst.msk [vmem:[%s186 + $0x48] sm:$0xff] %vm196, 0.0
          %207 = vst.msk [vmem:[%s186 + $0x50] sm:$0xff] %vm196, 0.0
          %208 = vst.msk [vmem:[%s186 + $0x58] sm:$0xff] %vm196, 0.0
          %209 = vst.msk [vmem:[%s186 + $0x60] sm:$0xff] %vm196, 0.0
          %210 = vst.msk [vmem:[%s186 + $0x68] sm:$0xff] %vm196, 0.0
          %211 = vst.msk [vmem:[%s186 + $0x70] sm:$0xff] %vm196, 0.0
          %212 = vst.msk [vmem:[%s186 + $0x78] sm:$0xff] %vm196, 0.0
          %213 = vst.msk [vmem:[%s191] sm:$0xff] %vm196, 0.0
          %214 = vst.msk [vmem:[%s191 + $0x8] sm:$0xff] %vm196, 0.0
          %215 = vst.msk [vmem:[%s191 + $0x10] sm:$0xff] %vm196, 0.0
          %216 = vst.msk [vmem:[%s191 + $0x18] sm:$0xff] %vm196, 0.0
          %217 = vst.msk [vmem:[%s191 + $0x20] sm:$0xff] %vm196, 0.0
          %218 = vst.msk [vmem:[%s191 + $0x28] sm:$0xff] %vm196, 0.0
          %219 = vst.msk [vmem:[%s191 + $0x30] sm:$0xff] %vm196, 0.0
          %220 = vst.msk [vmem:[%s191 + $0x38] sm:$0xff] %vm196, 0.0
          %221 = vst.msk [vmem:[%s191 + $0x40] sm:$0xff] %vm196, 0.0
          %222 = vst.msk [vmem:[%s191 + $0x48] sm:$0xff] %vm196, 0.0
          %223 = vst.msk [vmem:[%s191 + $0x50] sm:$0xff] %vm196, 0.0
          %224 = vst.msk [vmem:[%s191 + $0x58] sm:$0xff] %vm196, 0.0
          %225 = vst.msk [vmem:[%s191 + $0x60] sm:$0xff] %vm196, 0.0
          %226 = vst.msk [vmem:[%s191 + $0x68] sm:$0xff] %vm196, 0.0
          %227 = vst.msk [vmem:[%s191 + $0x70] sm:$0xff] %vm196, 0.0
          %228 = vst.msk [vmem:[%s191 + $0x78] sm:$0xff] %vm196, 0.0
        $region32: #{tpu_custom_call.1} parent=23 // pred_fallthru
          _
        %v229 = vld [vmem:[%s156] sm:$0xff]
        %v230 = vld [vmem:[%s156 + $0x8] sm:$0xff]
        %v231 = vld [vmem:[%s156 + $0x10] sm:$0xff]
        %v232 = vld [vmem:[%s156 + $0x18] sm:$0xff]
        %v233 = vld [vmem:[%s156 + $0x20] sm:$0xff]
        %v234 = vld [vmem:[%s156 + $0x28] sm:$0xff]
        %v235 = vld [vmem:[%s156 + $0x30] sm:$0xff]
        %v236 = vld [vmem:[%s156 + $0x38] sm:$0xff]
        %v237 = vld [vmem:[%s156 + $0x40] sm:$0xff]
        %v238 = vld [vmem:[%s156 + $0x48] sm:$0xff]
        %v239 = vld [vmem:[%s156 + $0x50] sm:$0xff]
        %v240 = vld [vmem:[%s156 + $0x58] sm:$0xff]
        %v241 = vld [vmem:[%s156 + $0x60] sm:$0xff]
        %v242 = vld [vmem:[%s156 + $0x68] sm:$0xff]
        %v243 = vld [vmem:[%s156 + $0x70] sm:$0xff]
        %v244 = vld [vmem:[%s156 + $0x78] sm:$0xff]
        %v245 = vld [vmem:[%s186] sm:$0xff]
        %v246 = vld [vmem:[%s186 + $0x8] sm:$0xff]
        %v247 = vld [vmem:[%s186 + $0x10] sm:$0xff]
        %v248 = vld [vmem:[%s186 + $0x18] sm:$0xff]
        %v249 = vld [vmem:[%s186 + $0x20] sm:$0xff]
        %v250 = vld [vmem:[%s186 + $0x28] sm:$0xff]
        %v251 = vld [vmem:[%s186 + $0x30] sm:$0xff]
        %v252 = vld [vmem:[%s186 + $0x38] sm:$0xff]
        %v253 = vld [vmem:[%s186 + $0x40] sm:$0xff]
        %v254 = vld [vmem:[%s186 + $0x48] sm:$0xff]
        %v255 = vld [vmem:[%s186 + $0x50] sm:$0xff]
        %v256 = vld [vmem:[%s186 + $0x58] sm:$0xff]
        %v257 = vld [vmem:[%s186 + $0x60] sm:$0xff]
        %v258 = vld [vmem:[%s186 + $0x68] sm:$0xff]
        %v259 = vld [vmem:[%s186 + $0x70] sm:$0xff]
        %v260 = vld [vmem:[%s186 + $0x78] sm:$0xff]
        %261 = vadd.xlane.f32.xlu0 %v229
        %v262 = vpop.xlane.xlu0 %261
        %263 = vadd.xlane.f32.xlu0 %v230
        %v264 = vpop.xlane.xlu0 %263
        %265 = vadd.xlane.f32.xlu0 %v231
        %v266 = vpop.xlane.xlu0 %265
        %267 = vadd.xlane.f32.xlu0 %v232
        %v268 = vpop.xlane.xlu0 %267
        %269 = vadd.xlane.f32.xlu0 %v233
        %v270 = vpop.xlane.xlu0 %269
        %271 = vadd.xlane.f32.xlu0 %v234
        %v272 = vpop.xlane.xlu0 %271
        %273 = vadd.xlane.f32.xlu0 %v235
        %v274 = vpop.xlane.xlu0 %273
        %275 = vadd.xlane.f32.xlu0 %v236
        %v276 = vpop.xlane.xlu0 %275
        %277 = vadd.xlane.f32.xlu0 %v237
        %v278 = vpop.xlane.xlu0 %277
        %279 = vadd.xlane.f32.xlu0 %v238
        %v280 = vpop.xlane.xlu0 %279
        %281 = vadd.xlane.f32.xlu0 %v239
        %v282 = vpop.xlane.xlu0 %281
        %283 = vadd.xlane.f32.xlu0 %v240
        %v284 = vpop.xlane.xlu0 %283
        %285 = vadd.xlane.f32.xlu0 %v241
        %v286 = vpop.xlane.xlu0 %285
        %287 = vadd.xlane.f32.xlu0 %v242
        %v288 = vpop.xlane.xlu0 %287
        %289 = vadd.xlane.f32.xlu0 %v243
        %v290 = vpop.xlane.xlu0 %289
        %291 = vadd.xlane.f32.xlu0 %v244
        %v292 = vpop.xlane.xlu0 %291
        %v293 = vadd.f32 %v245, %v262
        %v294 = vadd.f32 %v246, %v264
        %v295 = vadd.f32 %v247, %v266
        %v296 = vadd.f32 %v248, %v268
        %v297 = vadd.f32 %v249, %v270
        %v298 = vadd.f32 %v250, %v272
        %v299 = vadd.f32 %v251, %v274
        %v300 = vadd.f32 %v252, %v276
        %v301 = vadd.f32 %v253, %v278
        %v302 = vadd.f32 %v254, %v280
        %v303 = vadd.f32 %v255, %v282
        %v304 = vadd.f32 %v256, %v284
        %v305 = vadd.f32 %v257, %v286
        %v306 = vadd.f32 %v258, %v288
        %v307 = vadd.f32 %v259, %v290
        %v308 = vadd.f32 %v260, %v292
        %vm309 = vcmask 7168
        %310 = vst.msk [vmem:[%s186] sm:$0xff] %vm309, %v293
        %311 = vst.msk [vmem:[%s186 + $0x8] sm:$0xff] %vm309, %v294
        %312 = vst.msk [vmem:[%s186 + $0x10] sm:$0xff] %vm309, %v295
        %313 = vst.msk [vmem:[%s186 + $0x18] sm:$0xff] %vm309, %v296
        %314 = vst.msk [vmem:[%s186 + $0x20] sm:$0xff] %vm309, %v297
        %315 = vst.msk [vmem:[%s186 + $0x28] sm:$0xff] %vm309, %v298
        %316 = vst.msk [vmem:[%s186 + $0x30] sm:$0xff] %vm309, %v299
        %317 = vst.msk [vmem:[%s186 + $0x38] sm:$0xff] %vm309, %v300
        %318 = vst.msk [vmem:[%s186 + $0x40] sm:$0xff] %vm309, %v301
        %319 = vst.msk [vmem:[%s186 + $0x48] sm:$0xff] %vm309, %v302
        %320 = vst.msk [vmem:[%s186 + $0x50] sm:$0xff] %vm309, %v303
        %321 = vst.msk [vmem:[%s186 + $0x58] sm:$0xff] %vm309, %v304
        %322 = vst.msk [vmem:[%s186 + $0x60] sm:$0xff] %vm309, %v305
        %323 = vst.msk [vmem:[%s186 + $0x68] sm:$0xff] %vm309, %v306
        %324 = vst.msk [vmem:[%s186 + $0x70] sm:$0xff] %vm309, %v307
        %325 = vst.msk [vmem:[%s186 + $0x78] sm:$0xff] %vm309, %v308
        %v326 = vld [vmem:[%s191] sm:$0xff]
        %v327 = vld [vmem:[%s191 + $0x8] sm:$0xff]
        %v328 = vld [vmem:[%s191 + $0x10] sm:$0xff]
        %v329 = vld [vmem:[%s191 + $0x18] sm:$0xff]
        %v330 = vld [vmem:[%s191 + $0x20] sm:$0xff]
        %v331 = vld [vmem:[%s191 + $0x28] sm:$0xff]
        %v332 = vld [vmem:[%s191 + $0x30] sm:$0xff]
        %v333 = vld [vmem:[%s191 + $0x38] sm:$0xff]
        %v334 = vld [vmem:[%s191 + $0x40] sm:$0xff]
        %v335 = vld [vmem:[%s191 + $0x48] sm:$0xff]
        %v336 = vld [vmem:[%s191 + $0x50] sm:$0xff]
        %v337 = vld [vmem:[%s191 + $0x58] sm:$0xff]
        %v338 = vld [vmem:[%s191 + $0x60] sm:$0xff]
        %v339 = vld [vmem:[%s191 + $0x68] sm:$0xff]
        %v340 = vld [vmem:[%s191 + $0x70] sm:$0xff]
        %v341 = vld [vmem:[%s191 + $0x78] sm:$0xff]
        %v342 = vmul.f32 %v229, %v229
        %v343 = vmul.f32 %v230, %v230
        %v344 = vmul.f32 %v231, %v231
        %v345 = vmul.f32 %v232, %v232
        %v346 = vmul.f32 %v233, %v233
        %v347 = vmul.f32 %v234, %v234
        %v348 = vmul.f32 %v235, %v235
        %v349 = vmul.f32 %v236, %v236
        %v350 = vmul.f32 %v237, %v237
        %v351 = vmul.f32 %v238, %v238
        %v352 = vmul.f32 %v239, %v239
        %v353 = vmul.f32 %v240, %v240
        %v354 = vmul.f32 %v241, %v241
        %v355 = vmul.f32 %v242, %v242
        %v356 = vmul.f32 %v243, %v243
        %v357 = vmul.f32 %v244, %v244
        %358 = vadd.xlane.f32.xlu0 %v342
        %v359 = vpop.xlane.xlu0 %358
        %360 = vadd.xlane.f32.xlu0 %v343
        %v361 = vpop.xlane.xlu0 %360
        %362 = vadd.xlane.f32.xlu0 %v344
        %v363 = vpop.xlane.xlu0 %362
        %364 = vadd.xlane.f32.xlu0 %v345
        %v365 = vpop.xlane.xlu0 %364
        %366 = vadd.xlane.f32.xlu0 %v346
        %v367 = vpop.xlane.xlu0 %366
        %368 = vadd.xlane.f32.xlu0 %v347
        %v369 = vpop.xlane.xlu0 %368
        %370 = vadd.xlane.f32.xlu0 %v348
        %v371 = vpop.xlane.xlu0 %370
        %372 = vadd.xlane.f32.xlu0 %v349
        %v373 = vpop.xlane.xlu0 %372
        %374 = vadd.xlane.f32.xlu0 %v350
        %v375 = vpop.xlane.xlu0 %374
        %376 = vadd.xlane.f32.xlu0 %v351
        %v377 = vpop.xlane.xlu0 %376
        %378 = vadd.xlane.f32.xlu0 %v352
        %v379 = vpop.xlane.xlu0 %378
        %380 = vadd.xlane.f32.xlu0 %v353
        %v381 = vpop.xlane.xlu0 %380
        %382 = vadd.xlane.f32.xlu0 %v354
        %v383 = vpop.xlane.xlu0 %382
        %384 = vadd.xlane.f32.xlu0 %v355
        %v385 = vpop.xlane.xlu0 %384
        %386 = vadd.xlane.f32.xlu0 %v356
        %v387 = vpop.xlane.xlu0 %386
        %388 = vadd.xlane.f32.xlu0 %v357
        %v389 = vpop.xlane.xlu0 %388
        %v390 = vadd.f32 %v326, %v359
        %v391 = vadd.f32 %v327, %v361
        %v392 = vadd.f32 %v328, %v363
        %v393 = vadd.f32 %v329, %v365
        %v394 = vadd.f32 %v330, %v367
        %v395 = vadd.f32 %v331, %v369
        %v396 = vadd.f32 %v332, %v371
        %v397 = vadd.f32 %v333, %v373
        %v398 = vadd.f32 %v334, %v375
        %v399 = vadd.f32 %v335, %v377
        %v400 = vadd.f32 %v336, %v379
        %v401 = vadd.f32 %v337, %v381
        %v402 = vadd.f32 %v338, %v383
        %v403 = vadd.f32 %v339, %v385
        %v404 = vadd.f32 %v340, %v387
        %v405 = vadd.f32 %v341, %v389
        %406 = vst.msk [vmem:[%s191] sm:$0xff] %vm309, %v390
        %407 = vst.msk [vmem:[%s191 + $0x8] sm:$0xff] %vm309, %v391
        %408 = vst.msk [vmem:[%s191 + $0x10] sm:$0xff] %vm309, %v392
        %409 = vst.msk [vmem:[%s191 + $0x18] sm:$0xff] %vm309, %v393
        %410 = vst.msk [vmem:[%s191 + $0x20] sm:$0xff] %vm309, %v394
        %411 = vst.msk [vmem:[%s191 + $0x28] sm:$0xff] %vm309, %v395
        %412 = vst.msk [vmem:[%s191 + $0x30] sm:$0xff] %vm309, %v396
        %413 = vst.msk [vmem:[%s191 + $0x38] sm:$0xff] %vm309, %v397
        %414 = vst.msk [vmem:[%s191 + $0x40] sm:$0xff] %vm309, %v398
        %415 = vst.msk [vmem:[%s191 + $0x48] sm:$0xff] %vm309, %v399
        %416 = vst.msk [vmem:[%s191 + $0x50] sm:$0xff] %vm309, %v400
        %417 = vst.msk [vmem:[%s191 + $0x58] sm:$0xff] %vm309, %v401
        %418 = vst.msk [vmem:[%s191 + $0x60] sm:$0xff] %vm309, %v402
        %419 = vst.msk [vmem:[%s191 + $0x68] sm:$0xff] %vm309, %v403
        %420 = vst.msk [vmem:[%s191 + $0x70] sm:$0xff] %vm309, %v404
        %421 = vst.msk [vmem:[%s191 + $0x78] sm:$0xff] %vm309, %v405
        %p422 = scmp.lt.s32.totalorder %s21, 1
        %s423 = scalar_select %p422, %s21, 1
        %s424 = smul.addr %s423, 16
        %s425 = smul.addr %s424, 8
        %s426 = scalar_lea.vmem %s1, %s425
        %p427 = scmp.lt.s32.totalorder %s21, 1
        %s428 = scalar_select %p427, %s21, 1
        %s429 = smul.addr %s428, 16
        %s430 = smul.addr %s429, 8
        %s431 = scalar_lea.vmem %s2, %s430
        // Predicated region
        $region33: #{tpu_custom_call.1} parent=23 // pred_check
          %p432 = pneg %p75
        $region34: #{tpu_custom_call.1} parent=23 // pred_check_branch
          %434 = sbr.rel (%p432) target = $region36
        $region35: #{tpu_custom_call.1} parent=23 // pred_region
          _
        $region36: #{tpu_custom_call.1} parent=23 // pred_fallthru
          _
        // Predicated region
        $region37: #{tpu_custom_call.1} parent=23 // pred_check
          %p435 = pneg %p101
        $region38: #{tpu_custom_call.1} parent=23 // pred_check_branch
          %437 = sbr.rel (%p435) target = $region40
        $region39: #{tpu_custom_call.1} parent=23 // pred_region
          _
        $region40: #{tpu_custom_call.1} parent=23 // pred_fallthru
          _
      $region24: #{tpu_custom_call.1} parent=5 // pred_fallthru
        _
      %p438 = scmp.le.s32.totalorder 2, %s12
      // Predicated region
      $region41: #{tpu_custom_call.1} parent=5 // pred_check
        %p439 = pneg %p438
      $region42: #{tpu_custom_call.1} parent=5 // pred_check_branch
        %441 = sbr.rel (%p439) target = $region44
      $region43: #{tpu_custom_call.1} parent=5 // pred_region
        %s442 = ssub.s32 %s12, 2
        // Predicated region
        $region45: #{tpu_custom_call.1} parent=43 // pred_check
          %p443 = pneg %p81
        $region46: #{tpu_custom_call.1} parent=43 // pred_check_branch
          %445 = sbr.rel (%p443) target = $region48
        $region47: #{tpu_custom_call.1} parent=43 // pred_region
          %p446 = scmp.lt.s32.totalorder %s23, 1
          %s447 = scalar_select %p446, %s23, 1
          %s448 = smul.addr %s447, 16
          %s449 = smul.addr %s448, 8
          %s450 = scalar_lea.vmem %s1, %s449
        $region48: #{tpu_custom_call.1} parent=43 // pred_fallthru
          _
        // Predicated region
        $region49: #{tpu_custom_call.1} parent=43 // pred_check
          %p451 = pneg %p107
        $region50: #{tpu_custom_call.1} parent=43 // pred_check_branch
          %453 = sbr.rel (%p451) target = $region52
        $region51: #{tpu_custom_call.1} parent=43 // pred_region
          %p454 = scmp.lt.s32.totalorder %s23, 1
          %s455 = scalar_select %p454, %s23, 1
          %s456 = smul.addr %s455, 16
          %s457 = smul.addr %s456, 8
          %s458 = scalar_lea.vmem %s2, %s457
        $region52: #{tpu_custom_call.1} parent=43 // pred_fallthru
          _
      $region44: #{tpu_custom_call.1} parent=5 // pred_fallthru
        _
    $region6: #{tpu_custom_call.1} parent=1 // loop_footer
      %s16 = sadd.s32 1, %s12
    $region7: #{tpu_custom_call.1} parent=1 // loop_footer_branch
      %11 = sbr.rel target = $region3
    $region8: #{tpu_custom_call.1} parent=1 // loop_exit
      _
    %459 = vsyncpa [#allocation3], 1
    %s460 = scalar_lea.sflag [#allocation3], 1
    %461 = vsyncpa %s460, 1

</llo_original>
